<compile_context>
chip_gen: v5e
topology: v5e:2x2
jax: 0.10.0
libtpu: 0.0.40
codegen_flags: <defaults>
</compile_context>

<pallas_src>
import math

import jax
import jax.numpy as jnp
from jax.experimental import pallas as pl
from jax.experimental.pallas import tpu as pltpu


# ---------------------------------------------------------------------------
# Pallas kernel: per-(n, c) spatial partial sums
# ---------------------------------------------------------------------------
def _partial_sums_kernel(x_ref, y_ref, out_ref,
                         gt_acc, inter_acc, pred_acc, bce_acc):
    """Accumulate per-row [sum_gt, intersect, sum_pred, bce_sum] over S tiles.

    x_ref  : (tr, ts) logits, native dtype (cast to f32 in-kernel)
    y_ref  : (tr, ts) one-hot target, native dtype (cast to f32 in-kernel)
    out_ref: (tr, 128) f32 -- lanes 0..3 carry the four stats (lane-dense)
    """
    j = pl.program_id(1)

    @pl.when(j == 0)
    def _():
        gt_acc[...] = jnp.zeros_like(gt_acc)
        inter_acc[...] = jnp.zeros_like(inter_acc)
        pred_acc[...] = jnp.zeros_like(pred_acc)
        bce_acc[...] = jnp.zeros_like(bce_acc)

    x = x_ref[...].astype(jnp.float32)
    y = y_ref[...].astype(jnp.float32)

    # Share exp(-|x|) between sigmoid and the stable BCE-with-logits.
    e = jnp.exp(-jnp.abs(x))
    inv = pl.reciprocal(1.0 + e)                 # exact (approx=False), EUP slot
    p = jnp.where(x >= 0.0, 1.0, e) * inv        # sigmoid(x)
    bce = jnp.maximum(x, 0.0) - x * y + jnp.log1p(e)

    gt_acc[...] += jnp.sum(y, axis=-1, keepdims=True)
    inter_acc[...] += jnp.sum(p * y, axis=-1, keepdims=True)
    pred_acc[...] += jnp.sum(p, axis=-1, keepdims=True)
    bce_acc[...] += jnp.sum(bce, axis=-1, keepdims=True)

    @pl.when(j == pl.num_programs(1) - 1)
    def _():
        lane = jax.lax.broadcasted_iota(jnp.int32, out_ref.shape, 1)
        out_ref[...] = (jnp.where(lane == 0, gt_acc[...], 0.0)
                        + jnp.where(lane == 1, inter_acc[...], 0.0)
                        + jnp.where(lane == 2, pred_acc[...], 0.0)
                        + jnp.where(lane == 3, bce_acc[...], 0.0))


# ---------------------------------------------------------------------------
# Tiling helpers
# ---------------------------------------------------------------------------
def _round_up(a, m):
    return (a + m - 1) // m * m


def _sublane_multiple(dtype):
    # f32 -> 8, bf16 -> 16, int8/bool -> 32 (packed-dtype sublane tiling)
    return max(8, 32 // dtype.itemsize)


def _largest_divisor(n, step, cap):
    """Largest d <= cap with d % step == 0 and n % d == 0 (assumes n % step == 0)."""
    best = step
    for d in range(step, min(cap, n) + 1, step):
        if n % d == 0:
            best = d
    return best


# ---------------------------------------------------------------------------
# Wrapper = Part_DC_and_BCE_loss.forward
# ---------------------------------------------------------------------------
def part_dc_and_bce_loss(net_output, target, *, weight_ce=1.0, weight_dice=1.0,
                         smooth=1.0, part_label=(14,),
                         vmem_tile_budget_bytes=24 << 20):
    """JAX/Pallas port of Part_DC_and_BCE_loss.forward (do_bg=True,
    use_ignore_label=False, batch_dice=False).  Inputs may be bf16/f32 logits
    and int8/bool/float one-hot targets; no wrapper-side upcast is performed."""
    x = net_output
    y = target
    if y.dtype == jnp.bool_:
        y = y.astype(jnp.int8)          # i1 memrefs are awkward; 1-byte int is safe
    assert x.shape == y.shape, "target must be one-hot with the same shape as net_output"

    N, C = x.shape[0], x.shape[1]
    S = 1
    for d in x.shape[2:]:
        S *= d
    R = N * C

    x2 = x.reshape(R, S)
    y2 = y.reshape(R, S)

    # ---- tiling: large tiles, divisor-based so no pad in the common case ----
    sub = max(_sublane_multiple(x.dtype), _sublane_multiple(y.dtype))
    R_pad = _round_up(R, sub)
    S_work = _round_up(S, 128)

    bytes_per_elem = x.dtype.itemsize + y.dtype.itemsize
    # 2 inputs x 2 pipeline buffers x tile must stay within the VMEM budget
    max_tile_elems = max(sub * 128, vmem_tile_budget_bytes // (2 * bytes_per_elem))

    ts_cap = min(8192, max(128, max_tile_elems // sub))
    ts = _largest_divisor(S_work, 128, ts_cap)

    tr_cap = min(512, max(sub, max_tile_elems // ts), R_pad)
    cands = [d for d in range(sub, tr_cap + 1, sub) if R_pad % d == 0]
    two_blk = [d for d in cands if R_pad // d >= 2]   # keep >=2 row blocks (megacore)
    tr = max(two_blk) if two_blk else max(cands)

    pad_r, pad_s = R_pad - R, S_work - S
    if pad_r or pad_s:
        # Fallback only; padded zeros are corrected analytically below.
        x2 = jnp.pad(x2, ((0, pad_r), (0, pad_s)))
        y2 = jnp.pad(y2, ((0, pad_r), (0, pad_s)))

    cost = pl.CostEstimate(
        flops=int(12 * R * S),
        transcendentals=int(3 * R * S),
        bytes_accessed=int(x2.size * x2.dtype.itemsize
                           + y2.size * y2.dtype.itemsize
                           + R_pad * 128 * 4),
    )

    stats = pl.pallas_call(
        _partial_sums_kernel,
        out_shape=jax.ShapeDtypeStruct((R_pad, 128), jnp.float32),
        grid_spec=pltpu.PrefetchScalarGridSpec(
            num_scalar_prefetch=0,
            grid=(R_pad // tr, S_work // ts),
            in_specs=[pl.BlockSpec((tr, ts), lambda i, j: (i, j)),
                      pl.BlockSpec((tr, ts), lambda i, j: (i, j))],
            out_specs=pl.BlockSpec((tr, 128), lambda i, j: (i, 0)),
            scratch_shapes=[pltpu.VMEM((tr, 1), jnp.float32)] * 4,
        ),
        compiler_params=pltpu.CompilerParams(
            dimension_semantics=("parallel", "arbitrary"),
            vmem_limit_bytes=64 * 1024 * 1024),
        cost_estimate=cost,
    )(x2, y2)

    sum_gt = stats[:R, 0].reshape(N, C)
    intersect = stats[:R, 1].reshape(N, C)
    sum_pred = stats[:R, 2].reshape(N, C)
    bce_sum = stats[:R, 3].reshape(N, C)

    # Padded spatial columns were zeros (x=0, y=0): sigmoid(0)=0.5 and
    # bce(0,0)=log 2, so remove their closed-form contribution here instead of
    # masking every element in the kernel.
    if pad_s:
        sum_pred = sum_pred - 0.5 * pad_s
        bce_sum = bce_sum - math.log(2.0) * pad_s

    # batch_channel_mask: zero the part_label channels that have no GT voxels
    is_part = jnp.zeros((C,), dtype=bool).at[jnp.asarray(part_label)].set(True)
    mask = jnp.where(is_part[None, :] & (sum_gt <= 0.0), 0.0, 1.0)

    # ---- soft dice (apply_nonlin=sigmoid, batch_dice=False, do_bg=True) ----
    dc = (2.0 * intersect * mask + smooth) / jnp.clip(
        sum_gt * mask + sum_pred * mask + smooth, 1e-8)
    dc_loss = -jnp.mean(dc)

    # ---- BCE-with-logits, mean over spatial dims, masked mean over (N, C) ----
    ce_per_nc = bce_sum / S
    ce_loss = jnp.sum(ce_per_nc * mask) / jnp.clip(jnp.sum(mask), 1e-8)

    return weight_ce * ce_loss + weight_dice * dc_loss


# ---------------------------------------------------------------------------
# Pure-JAX reference mirroring the PyTorch module
# ---------------------------------------------------------------------------
def _reference(net_output, target, *, weight_ce=1.0, weight_dice=1.0,
               smooth=1.0, part_label=(14,)):
    x = net_output.astype(jnp.float32)
    y = target.astype(jnp.float32)
    N, C = x.shape[0], x.shape[1]
    axes = tuple(range(2, x.ndim))

    is_part = jnp.zeros((C,), dtype=bool).at[jnp.asarray(part_label)].set(True)
    has_any = jnp.any(y > 0, axis=axes)
    mask = jnp.where(is_part[None, :] & (~has_any), 0.0, 1.0)

    p = jax.nn.sigmoid(x)
    intersect = jnp.sum(p * y, axis=axes) * mask
    sum_pred = jnp.sum(p, axis=axes) * mask
    sum_gt = jnp.sum(y, axis=axes) * mask
    dc = (2.0 * intersect + smooth) / jnp.clip(sum_gt + sum_pred + smooth, 1e-8)
    dc_loss = -jnp.mean(dc)

    bce = jnp.maximum(x, 0.0) - x * y + jnp.log1p(jnp.exp(-jnp.abs(x)))
    ce_loss = jnp.sum(jnp.mean(bce, axis=axes) * mask) / jnp.clip(jnp.sum(mask), 1e-8)
    return weight_ce * ce_loss + weight_dice * dc_loss


if __name__ == "__main__":
    key = jax.random.PRNGKey(0)
    N, C, H, W = 2, 16, 16, 16  # C=16 so the default part_label=[14] is valid
    k1, k2 = jax.random.split(key)

    # Native dtypes: bf16 logits, int8 one-hot target (no wrapper upcast).
    net_output = jax.random.normal(k1, (N, C, H, W), dtype=jnp.float32).astype(jnp.bfloat16)
    target = (jax.random.uniform(k2, (N, C, H, W)) > 0.5).astype(jnp.int8)
    # make the part-label channel empty for batch 0 to exercise the mask logic
    target = target.at[0, 14].set(0)

    loss = jax.block_until_ready(part_dc_and_bce_loss(net_output, target))
    ref = jax.block_until_ready(_reference(net_output, target))

    # Small tolerance slack: the kernel's shared-exp sigmoid vs jax.nn.sigmoid
    # and tiled-vs-tree summation order differ by a few f32 ulps.
    assert jnp.allclose(loss, ref, rtol=1e-4, atol=1e-5), (loss, ref)

    print("KERNEL_OK")
</pallas_src>

<mosaic_0001>
module attributes {stable_mosaic.version = 11 : i64} {
  func.func @_partial_sums_kernel(%arg0: i32, %arg1: i32, %arg2: memref<32x256xbf16, #tpu.memory_space<vmem>>, %arg3: memref<32x256xi8, #tpu.memory_space<vmem>>, %arg4: memref<32x128xf32, #tpu.memory_space<vmem>>, %arg5: memref<32x1xf32, #tpu.memory_space<vmem>>, %arg6: memref<32x1xf32, #tpu.memory_space<vmem>>, %arg7: memref<32x1xf32, #tpu.memory_space<vmem>>, %arg8: memref<32x1xf32, #tpu.memory_space<vmem>>) attributes {dimension_semantics = [#tpu.dimension_semantics<parallel>, #tpu.dimension_semantics<arbitrary>], iteration_bounds = array<i64: 1, 1>, scalar_prefetch = 0 : i64, scratch_operands = 4 : i64, tpu.core_type = #tpu.core_type<tc>, window_params = [{transform_indices = @transform_0, window_bounds = array<i64: 32, 256>}, {transform_indices = @transform_1, window_bounds = array<i64: 32, 256>}, {transform_indices = @transform_2, window_bounds = array<i64: 32, 128>}]} {
    %c0_i32 = arith.constant 0 : i32
    %0 = arith.cmpi eq, %arg1, %c0_i32 : i32
    %1 = arith.extui %0 : i1 to i32
    %c0_i32_0 = arith.constant 0 : i32
    %2 = arith.cmpi ne, %1, %c0_i32_0 : i32
    scf.if %2 {
      %cst_30 = arith.constant 0.000000e+00 : f32
      %49 = vector.broadcast %cst_30 : f32 to vector<32x1xf32>
      %c0_31 = arith.constant 0 : index
      %c0_32 = arith.constant 0 : index
      %50 = vector.load %arg5[%c0_31, %c0_32] : memref<32x1xf32, #tpu.memory_space<vmem>>, vector<32x1xf32>
      tpu.vector_store %arg5[%c0_31, %c0_32], %49 {strides = array<i32>} : memref<32x1xf32, #tpu.memory_space<vmem>>, vector<32x1xf32>,
      %cst_33 = arith.constant 0.000000e+00 : f32
      %51 = vector.broadcast %cst_33 : f32 to vector<32x1xf32>
      %c0_34 = arith.constant 0 : index
      %c0_35 = arith.constant 0 : index
      %52 = vector.load %arg6[%c0_34, %c0_35] : memref<32x1xf32, #tpu.memory_space<vmem>>, vector<32x1xf32>
      tpu.vector_store %arg6[%c0_34, %c0_35], %51 {strides = array<i32>} : memref<32x1xf32, #tpu.memory_space<vmem>>, vector<32x1xf32>,
      %cst_36 = arith.constant 0.000000e+00 : f32
      %53 = vector.broadcast %cst_36 : f32 to vector<32x1xf32>
      %c0_37 = arith.constant 0 : index
      %c0_38 = arith.constant 0 : index
      %54 = vector.load %arg7[%c0_37, %c0_38] : memref<32x1xf32, #tpu.memory_space<vmem>>, vector<32x1xf32>
      tpu.vector_store %arg7[%c0_37, %c0_38], %53 {strides = array<i32>} : memref<32x1xf32, #tpu.memory_space<vmem>>, vector<32x1xf32>,
      %cst_39 = arith.constant 0.000000e+00 : f32
      %55 = vector.broadcast %cst_39 : f32 to vector<32x1xf32>
      %c0_40 = arith.constant 0 : index
      %c0_41 = arith.constant 0 : index
      %56 = vector.load %arg8[%c0_40, %c0_41] : memref<32x1xf32, #tpu.memory_space<vmem>>, vector<32x1xf32>
      tpu.vector_store %arg8[%c0_40, %c0_41], %55 {strides = array<i32>} : memref<32x1xf32, #tpu.memory_space<vmem>>, vector<32x1xf32>,
    } else {
    }
    %c0 = arith.constant 0 : index
    %c0_1 = arith.constant 0 : index
    %3 = vector.load %arg2[%c0, %c0_1] : memref<32x256xbf16, #tpu.memory_space<vmem>>, vector<32x256xbf16>
    %4 = arith.extf %3 : vector<32x256xbf16> to vector<32x256xf32>
    %c0_2 = arith.constant 0 : index
    %c0_3 = arith.constant 0 : index
    %5 = vector.load %arg3[%c0_2, %c0_3] : memref<32x256xi8, #tpu.memory_space<vmem>>, vector<32x256xi8>
    %6 = arith.sitofp %5 : vector<32x256xi8> to vector<32x256xf32>
    %7 = math.absf %4 : vector<32x256xf32>
    %cst = arith.constant 0.000000e+00 : f32
    %8 = vector.broadcast %cst : f32 to vector<32x256xf32>
    %9 = arith.subf %8, %7 : vector<32x256xf32>
    %10 = math.exp %9 : vector<32x256xf32>
    %cst_4 = arith.constant 1.000000e+00 : f32
    %11 = vector.broadcast %cst_4 : f32 to vector<32x256xf32>
    %12 = arith.addf %11, %10 : vector<32x256xf32>
    %13 = tpu.reciprocal %12 : vector<32x256xf32> -> vector<32x256xf32>
    %cst_5 = arith.constant 0.000000e+00 : f32
    %14 = vector.broadcast %cst_5 : f32 to vector<32x256xf32>
    %15 = arith.cmpf oge, %4, %14 : vector<32x256xf32>
    %cst_6 = arith.constant 1.000000e+00 : f32
    %16 = vector.broadcast %cst_6 : f32 to vector<32x256xf32>
    %17 = arith.select %15, %16, %10 : vector<32x256xi1>, vector<32x256xf32>
    %18 = arith.mulf %17, %13 : vector<32x256xf32>
    %cst_7 = arith.constant 0.000000e+00 : f32
    %19 = vector.broadcast %cst_7 : f32 to vector<32x256xf32>
    %20 = arith.maximumf %4, %19 : vector<32x256xf32>
    %21 = arith.mulf %4, %6 : vector<32x256xf32>
    %22 = arith.subf %20, %21 : vector<32x256xf32>
    %23 = math.log1p %10 : vector<32x256xf32>
    %24 = arith.addf %22, %23 : vector<32x256xf32>
    %c0_8 = arith.constant 0 : index
    %c0_9 = arith.constant 0 : index
    %25 = vector.load %arg5[%c0_8, %c0_9] : memref<32x1xf32, #tpu.memory_space<vmem>>, vector<32x1xf32>
    %cst_10 = arith.constant dense<0.000000e+00> : vector<32xf32>
    %26 = vector.multi_reduction <add>, %6, %cst_10 [1] : vector<32x256xf32> to vector<32xf32>
    %27 = vector.shape_cast %26 : vector<32xf32> to vector<32x1xf32>
    %28 = arith.addf %25, %27 : vector<32x1xf32>
    %c0_11 = arith.constant 0 : index
    %c0_12 = arith.constant 0 : index
    %29 = vector.load %arg5[%c0_11, %c0_12] : memref<32x1xf32, #tpu.memory_space<vmem>>, vector<32x1xf32>
    tpu.vector_store %arg5[%c0_11, %c0_12], %28 {strides = array<i32>} : memref<32x1xf32, #tpu.memory_space<vmem>>, vector<32x1xf32>,
    %c0_13 = arith.constant 0 : index
    %c0_14 = arith.constant 0 : index
    %30 = vector.load %arg6[%c0_13, %c0_14] : memref<32x1xf32, #tpu.memory_space<vmem>>, vector<32x1xf32>
    %31 = arith.mulf %18, %6 : vector<32x256xf32>
    %cst_15 = arith.constant dense<0.000000e+00> : vector<32xf32>
    %32 = vector.multi_reduction <add>, %31, %cst_15 [1] : vector<32x256xf32> to vector<32xf32>
    %33 = vector.shape_cast %32 : vector<32xf32> to vector<32x1xf32>
    %34 = arith.addf %30, %33 : vector<32x1xf32>
    %c0_16 = arith.constant 0 : index
    %c0_17 = arith.constant 0 : index
    %35 = vector.load %arg6[%c0_16, %c0_17] : memref<32x1xf32, #tpu.memory_space<vmem>>, vector<32x1xf32>
    tpu.vector_store %arg6[%c0_16, %c0_17], %34 {strides = array<i32>} : memref<32x1xf32, #tpu.memory_space<vmem>>, vector<32x1xf32>,
    %c0_18 = arith.constant 0 : index
    %c0_19 = arith.constant 0 : index
    %36 = vector.load %arg7[%c0_18, %c0_19] : memref<32x1xf32, #tpu.memory_space<vmem>>, vector<32x1xf32>
    %cst_20 = arith.constant dense<0.000000e+00> : vector<32xf32>
    %37 = vector.multi_reduction <add>, %18, %cst_20 [1] : vector<32x256xf32> to vector<32xf32>
    %38 = vector.shape_cast %37 : vector<32xf32> to vector<32x1xf32>
    %39 = arith.addf %36, %38 : vector<32x1xf32>
    %c0_21 = arith.constant 0 : index
    %c0_22 = arith.constant 0 : index
    %40 = vector.load %arg7[%c0_21, %c0_22] : memref<32x1xf32, #tpu.memory_space<vmem>>, vector<32x1xf32>
    tpu.vector_store %arg7[%c0_21, %c0_22], %39 {strides = array<i32>} : memref<32x1xf32, #tpu.memory_space<vmem>>, vector<32x1xf32>,
    %c0_23 = arith.constant 0 : index
    %c0_24 = arith.constant 0 : index
    %41 = vector.load %arg8[%c0_23, %c0_24] : memref<32x1xf32, #tpu.memory_space<vmem>>, vector<32x1xf32>
    %cst_25 = arith.constant dense<0.000000e+00> : vector<32xf32>
    %42 = vector.multi_reduction <add>, %24, %cst_25 [1] : vector<32x256xf32> to vector<32xf32>
    %43 = vector.shape_cast %42 : vector<32xf32> to vector<32x1xf32>
    %44 = arith.addf %41, %43 : vector<32x1xf32>
    %c0_26 = arith.constant 0 : index
    %c0_27 = arith.constant 0 : index
    %45 = vector.load %arg8[%c0_26, %c0_27] : memref<32x1xf32, #tpu.memory_space<vmem>>, vector<32x1xf32>
    tpu.vector_store %arg8[%c0_26, %c0_27], %44 {strides = array<i32>} : memref<32x1xf32, #tpu.memory_space<vmem>>, vector<32x1xf32>,
    %c0_i32_28 = arith.constant 0 : i32
    %46 = arith.cmpi eq, %arg1, %c0_i32_28 : i32
    %47 = arith.extui %46 : i1 to i32
    %c0_i32_29 = arith.constant 0 : i32
    %48 = arith.cmpi ne, %47, %c0_i32_29 : i32
    scf.if %48 {
      %49 = tpu.iota {dimensions = array<i32: 1>} : vector<32x128xi32>
      %c0_i32_30 = arith.constant 0 : i32
      %50 = vector.broadcast %c0_i32_30 : i32 to vector<32x128xi32>
      %51 = arith.cmpi eq, %49, %50 : vector<32x128xi32>
      %c0_31 = arith.constant 0 : index
      %c0_32 = arith.constant 0 : index
      %52 = vector.load %arg5[%c0_31, %c0_32] : memref<32x1xf32, #tpu.memory_space<vmem>>, vector<32x1xf32>
      %cst_33 = arith.constant 0.000000e+00 : f32
      %53 = vector.shape_cast %52 : vector<32x1xf32> to vector<32x1xf32>
      %54 = vector.broadcast %53 : vector<32x1xf32> to vector<32x128xf32>
      %55 = vector.broadcast %cst_33 : f32 to vector<32x128xf32>
      %56 = arith.select %51, %54, %55 : vector<32x128xi1>, vector<32x128xf32>
      %c1_i32 = arith.constant 1 : i32
      %57 = vector.broadcast %c1_i32 : i32 to vector<32x128xi32>
      %58 = arith.cmpi eq, %49, %57 : vector<32x128xi32>
      %c0_34 = arith.constant 0 : index
      %c0_35 = arith.constant 0 : index
      %59 = vector.load %arg6[%c0_34, %c0_35] : memref<32x1xf32, #tpu.memory_space<vmem>>, vector<32x1xf32>
      %cst_36 = arith.constant 0.000000e+00 : f32
      %60 = vector.shape_cast %59 : vector<32x1xf32> to vector<32x1xf32>
      %61 = vector.broadcast %60 : vector<32x1xf32> to vector<32x128xf32>
      %62 = vector.broadcast %cst_36 : f32 to vector<32x128xf32>
      %63 = arith.select %58, %61, %62 : vector<32x128xi1>, vector<32x128xf32>
      %64 = arith.addf %56, %63 : vector<32x128xf32>
      %c2_i32 = arith.constant 2 : i32
      %65 = vector.broadcast %c2_i32 : i32 to vector<32x128xi32>
      %66 = arith.cmpi eq, %49, %65 : vector<32x128xi32>
      %c0_37 = arith.constant 0 : index
      %c0_38 = arith.constant 0 : index
      %67 = vector.load %arg7[%c0_37, %c0_38] : memref<32x1xf32, #tpu.memory_space<vmem>>, vector<32x1xf32>
      %cst_39 = arith.constant 0.000000e+00 : f32
      %68 = vector.shape_cast %67 : vector<32x1xf32> to vector<32x1xf32>
      %69 = vector.broadcast %68 : vector<32x1xf32> to vector<32x128xf32>
      %70 = vector.broadcast %cst_39 : f32 to vector<32x128xf32>
      %71 = arith.select %66, %69, %70 : vector<32x128xi1>, vector<32x128xf32>
      %72 = arith.addf %64, %71 : vector<32x128xf32>
      %c3_i32 = arith.constant 3 : i32
      %73 = vector.broadcast %c3_i32 : i32 to vector<32x128xi32>
      %74 = arith.cmpi eq, %49, %73 : vector<32x128xi32>
      %c0_40 = arith.constant 0 : index
      %c0_41 = arith.constant 0 : index
      %75 = vector.load %arg8[%c0_40, %c0_41] : memref<32x1xf32, #tpu.memory_space<vmem>>, vector<32x1xf32>
      %cst_42 = arith.constant 0.000000e+00 : f32
      %76 = vector.shape_cast %75 : vector<32x1xf32> to vector<32x1xf32>
      %77 = vector.broadcast %76 : vector<32x1xf32> to vector<32x128xf32>
      %78 = vector.broadcast %cst_42 : f32 to vector<32x128xf32>
      %79 = arith.select %74, %77, %78 : vector<32x128xi1>, vector<32x128xf32>
      %80 = arith.addf %72, %79 : vector<32x128xf32>
      %c0_43 = arith.constant 0 : index
      %c0_44 = arith.constant 0 : index
      %81 = vector.load %arg4[%c0_43, %c0_44] : memref<32x128xf32, #tpu.memory_space<vmem>>, vector<32x128xf32>
      tpu.vector_store %arg4[%c0_43, %c0_44], %80 {strides = array<i32>} : memref<32x128xf32, #tpu.memory_space<vmem>>, vector<32x128xf32>,
    } else {
    }
    return
  }
  func.func @transform_0(%arg0: i32, %arg1: i32) -> (i32, i32) {
    %c0_i32 = arith.constant 0 : i32
    return %arg0, %arg1 : i32, i32
  }
  func.func @transform_1(%arg0: i32, %arg1: i32) -> (i32, i32) {
    %c0_i32 = arith.constant 0 : i32
    return %arg0, %arg1 : i32, i32
  }
  func.func @transform_2(%arg0: i32, %arg1: i32) -> (i32, i32) {
    %c0_i32 = arith.constant 0 : i32
    %c0_i32_0 = arith.constant 0 : i32
    return %arg0, %c0_i32 : i32, i32
  }
}

</mosaic_0001>

<llo_original>
// kernel: tpu_custom_call.1
$region0: #{tpu_custom_call.1}
  #allocation0 [shape = 'u32[]', space=smem, size = 0x4, offset = 0x4, fixed_abs, tag = 'smem constant byte address 0x4 - core index']
  #allocation1 [shape = 'u32[72,128]{1,0:T(1,128)}', space=vmem, size = 0x9000, scoped, tag = 'internal scratch']
  #allocation2 [shape = 'f32[32,1]{1,0:T(8,128)}', space=vmem, size = 0x4000, scoped, tag = 'scratch operand']
  #allocation3 [shape = 'f32[32,1]{1,0:T(8,128)}', space=vmem, size = 0x4000, scoped, tag = 'scratch operand']
  #allocation4 [shape = 'f32[32,1]{1,0:T(8,128)}', space=vmem, size = 0x4000, scoped, tag = 'scratch operand']
  #allocation5 [shape = 'f32[32,1]{1,0:T(8,128)}', space=vmem, size = 0x4000, scoped, tag = 'scratch operand']
  %s0 = inlined_call_operand.hbm [shape: bf16[32,256], index: 0, kind: input, shape index: {}]
  %s1 = inlined_call_operand.hbm [shape: s8[32,256], index: 1, kind: input, shape index: {}]
  %s2 = inlined_call_operand.hbm [shape: f32[32,128], index: 2, kind: output, shape index: {}]
  %s3 = sld [smem:[#allocation0]]
  $region34: #{tpu_custom_call.1} parent=0
    _
  %s5 = ssub.s32 1, %s3
  %s6 = scalar_select 0, %s5, %s3
  $region1: #{tpu_custom_call.1} parent=0
    #allocation6 [shape = 'u8[16384]{0}', space=vmem, size = 0x4000, scoped, tag = 'input window, operand 0, single buffered']
    #allocation7 [shape = 's32[1]{0}', space=sflag, size = 0x4, scoped, tag = 'scoped memory for tpu_custom_call.1']
    #allocation8 [shape = 's32[1]{0}', space=sflag, size = 0x4, scoped, tag = 'scoped memory for tpu_custom_call.1']
    #allocation9 [shape = 'u8[8192]{0}', space=vmem, size = 0x2000, scoped, tag = 'input window, operand 1, single buffered']
    #allocation10 [shape = 's32[1]{0}', space=sflag, size = 0x4, scoped, tag = 'scoped memory for tpu_custom_call.1']
    #allocation11 [shape = 'u8[16384]{0}', space=vmem, size = 0x4000, scoped, tag = 'output window, operand 0, single buffered']
    %7 = vsyncpa [#allocation7], 0
    %8 = vsyncpa [#allocation10], 0
    %9 = vsyncpa [#allocation8], 0
    // Predicated region
    $region2: #{tpu_custom_call.1} parent=1 // pred_check
      _
    $region3: #{tpu_custom_call.1} parent=1 // pred_check_branch
      %11 = sbr.rel (0) target = $region5
    $region4: #{tpu_custom_call.1} parent=1 // pred_region
      %13 = vsyncadd [#allocation7], 0
      %s14 = sshll.u32 %s0, 4
      %s15 = int_to_ptr.hbm [resolvable:$true] %s14
      %s16 = sshll.u32 [#allocation6], 4
      %s17 = int_to_ptr.vmem [resolvable:$true] %s16
      %22 = dma.hbm_to_vmem [thread:$0]  %s15, 512, %s17, [#allocation7], 128, 128, 8
    $region5: #{tpu_custom_call.1} parent=1 // pred_fallthru
      _
    // Predicated region
    $region6: #{tpu_custom_call.1} parent=1 // pred_check
      _
    $region7: #{tpu_custom_call.1} parent=1 // pred_check_branch
      %24 = sbr.rel (0) target = $region9
    $region8: #{tpu_custom_call.1} parent=1 // pred_region
      %26 = vsyncadd [#allocation10], 0
      %s28 = sshll.u32 %s1, 4
      %s29 = int_to_ptr.hbm [resolvable:$true] %s28
      %s30 = sshll.u32 [#allocation9], 4
      %s31 = int_to_ptr.vmem [resolvable:$true] %s30
      %33 = dma.hbm_to_vmem [thread:$0]  %s29, 256, %s31, [#allocation10]
    $region9: #{tpu_custom_call.1} parent=1 // pred_fallthru
      _
    // Predicated region
    $region10: #{tpu_custom_call.1} parent=1 // pred_check
      _
    $region11: #{tpu_custom_call.1} parent=1 // pred_check_branch
      %35 = sbr.rel (0) target = $region13
    $region12: #{tpu_custom_call.1} parent=1 // pred_region
      %37 = dma.done [#allocation7], 512
    $region13: #{tpu_custom_call.1} parent=1 // pred_fallthru
      _
    // Predicated region
    $region14: #{tpu_custom_call.1} parent=1 // pred_check
      _
    $region15: #{tpu_custom_call.1} parent=1 // pred_check_branch
      %39 = sbr.rel (0) target = $region17
    $region16: #{tpu_custom_call.1} parent=1 // pred_region
      %41 = dma.done [#allocation10], 256
    $region17: #{tpu_custom_call.1} parent=1 // pred_fallthru
      _
    %p42 = scmp.eq.s32.totalorder 0, 0
    // Predicated region
    $region18: #{tpu_custom_call.1} parent=1 // pred_check
      %p43 = pneg %p42
    $region19: #{tpu_custom_call.1} parent=1 // pred_check_branch
      %45 = sbr.rel (%p43) target = $region21
    $region20: #{tpu_custom_call.1} parent=1 // pred_region
      %vm46 = vcmask 7168
      %47 = vst.msk [vmem:[#allocation2] sm:$0xff] %vm46, 0.0
      %48 = vst.msk [vmem:[#allocation2 + $0x8] sm:$0xff] %vm46, 0.0
      %49 = vst.msk [vmem:[#allocation2 + $0x10] sm:$0xff] %vm46, 0.0
      %50 = vst.msk [vmem:[#allocation2 + $0x18] sm:$0xff] %vm46, 0.0
      %51 = vst.msk [vmem:[#allocation3] sm:$0xff] %vm46, 0.0
      %52 = vst.msk [vmem:[#allocation3 + $0x8] sm:$0xff] %vm46, 0.0
      %53 = vst.msk [vmem:[#allocation3 + $0x10] sm:$0xff] %vm46, 0.0
      %54 = vst.msk [vmem:[#allocation3 + $0x18] sm:$0xff] %vm46, 0.0
      %55 = vst.msk [vmem:[#allocation4] sm:$0xff] %vm46, 0.0
      %56 = vst.msk [vmem:[#allocation4 + $0x8] sm:$0xff] %vm46, 0.0
      %57 = vst.msk [vmem:[#allocation4 + $0x10] sm:$0xff] %vm46, 0.0
      %58 = vst.msk [vmem:[#allocation4 + $0x18] sm:$0xff] %vm46, 0.0
      %59 = vst.msk [vmem:[#allocation5] sm:$0xff] %vm46, 0.0
      %60 = vst.msk [vmem:[#allocation5 + $0x8] sm:$0xff] %vm46, 0.0
      %61 = vst.msk [vmem:[#allocation5 + $0x10] sm:$0xff] %vm46, 0.0
      %62 = vst.msk [vmem:[#allocation5 + $0x18] sm:$0xff] %vm46, 0.0
    $region21: #{tpu_custom_call.1} parent=1 // pred_fallthru
      _
    %v63 = vld [vmem:[#allocation6] sm:$0xff]
    %v64 = vld [vmem:[#allocation6 + $0x8] sm:$0xff]
    %v65 = vld [vmem:[#allocation6 + $0x10] sm:$0xff]
    %v66 = vld [vmem:[#allocation6 + $0x18] sm:$0xff]
    %v67 = vunpack.c.l.bf16 %v63
    %v68 = vunpack.c.h.bf16 %v63
    %v69 = vunpack.c.l.bf16 %v64
    %v70 = vunpack.c.h.bf16 %v64
    %v71 = vunpack.c.l.bf16 %v65
    %v72 = vunpack.c.h.bf16 %v65
    %v73 = vunpack.c.l.bf16 %v66
    %v74 = vunpack.c.h.bf16 %v66
    %v75 = vld [vmem:[#allocation9] sm:$0xff]
    %v76 = vld [vmem:[#allocation9 + $0x8] sm:$0xff]
    %v77 = vunpack.c.0.s8 %v75
    %v78 = vunpack.c.0.s8 %v76
    %v79 = vunpack.c.1.s8 %v75
    %v80 = vunpack.c.1.s8 %v76
    %v81 = vunpack.c.2.s8 %v75
    %v82 = vunpack.c.2.s8 %v76
    %v83 = vunpack.c.3.s8 %v75
    %v84 = vunpack.c.3.s8 %v76
    %v85 = vcvt.s32.f32 %v77
    %v86 = vcvt.s32.f32 %v78
    %v87 = vcvt.s32.f32 %v79
    %v88 = vcvt.s32.f32 %v80
    %v89 = vcvt.s32.f32 %v81
    %v90 = vcvt.s32.f32 %v82
    %v91 = vcvt.s32.f32 %v83
    %v92 = vcvt.s32.f32 %v84
    %v93 = vand.u32 2147483647, %v67
    %v94 = vand.u32 2147483647, %v68
    %v95 = vand.u32 2147483647, %v69
    %v96 = vand.u32 2147483647, %v70
    %v97 = vand.u32 2147483647, %v71
    %v98 = vand.u32 2147483647, %v72
    %v99 = vand.u32 2147483647, %v73
    %v100 = vand.u32 2147483647, %v74
    %v101 = vsub.f32 0.0, %v93
    %v102 = vsub.f32 0.0, %v94
    %v103 = vsub.f32 0.0, %v95
    %v104 = vsub.f32 0.0, %v96
    %v105 = vsub.f32 0.0, %v97
    %v106 = vsub.f32 0.0, %v98
    %v107 = vsub.f32 0.0, %v99
    %v108 = vsub.f32 0.0, %v100
    %v109 = vmul.f32 %v101, 1.442695
    %v110 = vpow.pop %v109
    %v111 = vmul.f32 %v102, 1.442695
    %v112 = vpow.pop %v111
    %v113 = vmul.f32 %v103, 1.442695
    %v114 = vpow.pop %v113
    %v115 = vmul.f32 %v104, 1.442695
    %v116 = vpow.pop %v115
    %v117 = vmul.f32 %v105, 1.442695
    %v118 = vpow.pop %v117
    %v119 = vmul.f32 %v106, 1.442695
    %v120 = vpow.pop %v119
    %v121 = vmul.f32 %v107, 1.442695
    %v122 = vpow.pop %v121
    %v123 = vmul.f32 %v108, 1.442695
    %v124 = vpow.pop %v123
    %v125 = vadd.f32 %v110, 1.0
    %v126 = vadd.f32 %v112, 1.0
    %v127 = vadd.f32 %v114, 1.0
    %v128 = vadd.f32 %v116, 1.0
    %v129 = vadd.f32 %v118, 1.0
    %v130 = vadd.f32 %v120, 1.0
    %v131 = vadd.f32 %v122, 1.0
    %v132 = vadd.f32 %v124, 1.0
    %v133 = vrcp.pop %v125
    %v134 = vmul.f32 %v125, %v133
    %v135 = vsub.f32 1.0, %v134
    %v136 = vmul.f32 %v133, %v135
    %v137 = vadd.f32 %v133, %v136
    %vm138 = vweird.f32 %v125
    %vm139 = vweird.f32 %v133
    %vm140 = vmor %vm138, %vm139
    %v141 = vsel %vm140, %v133, %v137
    %v142 = vand.u32 2147483647, %v125
    %vm143 = vcmp.eq.f32.partialorder %v142, 8.507059e+37
    %v144 = vand.u32 %v125, 2147483648
    %v145 = vor.u32 1.1754944e-38, %v144
    %v146 = vsel %vm143, %v145, %v141
    %v147 = vrcp.pop %v126
    %v148 = vmul.f32 %v126, %v147
    %v149 = vsub.f32 1.0, %v148
    %v150 = vmul.f32 %v147, %v149
    %v151 = vadd.f32 %v147, %v150
    %vm152 = vweird.f32 %v126
    %vm153 = vweird.f32 %v147
    %vm154 = vmor %vm152, %vm153
    %v155 = vsel %vm154, %v147, %v151
    %v156 = vand.u32 2147483647, %v126
    %vm157 = vcmp.eq.f32.partialorder %v156, 8.507059e+37
    %v158 = vand.u32 %v126, 2147483648
    %v159 = vor.u32 1.1754944e-38, %v158
    %v160 = vsel %vm157, %v159, %v155
    %v161 = vrcp.pop %v127
    %v162 = vmul.f32 %v127, %v161
    %v163 = vsub.f32 1.0, %v162
    %v164 = vmul.f32 %v161, %v163
    %v165 = vadd.f32 %v161, %v164
    %vm166 = vweird.f32 %v127
    %vm167 = vweird.f32 %v161
    %vm168 = vmor %vm166, %vm167
    %v169 = vsel %vm168, %v161, %v165
    %v170 = vand.u32 2147483647, %v127
    %vm171 = vcmp.eq.f32.partialorder %v170, 8.507059e+37
    %v172 = vand.u32 %v127, 2147483648
    %v173 = vor.u32 1.1754944e-38, %v172
    %v174 = vsel %vm171, %v173, %v169
    %v175 = vrcp.pop %v128
    %v176 = vmul.f32 %v128, %v175
    %v177 = vsub.f32 1.0, %v176
    %v178 = vmul.f32 %v175, %v177
    %v179 = vadd.f32 %v175, %v178
    %vm180 = vweird.f32 %v128
    %vm181 = vweird.f32 %v175
    %vm182 = vmor %vm180, %vm181
    %v183 = vsel %vm182, %v175, %v179
    %v184 = vand.u32 2147483647, %v128
    %vm185 = vcmp.eq.f32.partialorder %v184, 8.507059e+37
    %v186 = vand.u32 %v128, 2147483648
    %v187 = vor.u32 1.1754944e-38, %v186
    %v188 = vsel %vm185, %v187, %v183
    %v189 = vrcp.pop %v129
    %v190 = vmul.f32 %v129, %v189
    %v191 = vsub.f32 1.0, %v190
    %v192 = vmul.f32 %v189, %v191
    %v193 = vadd.f32 %v189, %v192
    %vm194 = vweird.f32 %v129
    %vm195 = vweird.f32 %v189
    %vm196 = vmor %vm194, %vm195
    %v197 = vsel %vm196, %v189, %v193
    %v198 = vand.u32 2147483647, %v129
    %vm199 = vcmp.eq.f32.partialorder %v198, 8.507059e+37
    %v200 = vand.u32 %v129, 2147483648
    %v201 = vor.u32 1.1754944e-38, %v200
    %v202 = vsel %vm199, %v201, %v197
    %v203 = vrcp.pop %v130
    %v204 = vmul.f32 %v130, %v203
    %v205 = vsub.f32 1.0, %v204
    %v206 = vmul.f32 %v203, %v205
    %v207 = vadd.f32 %v203, %v206
    %vm208 = vweird.f32 %v130
    %vm209 = vweird.f32 %v203
    %vm210 = vmor %vm208, %vm209
    %v211 = vsel %vm210, %v203, %v207
    %v212 = vand.u32 2147483647, %v130
    %vm213 = vcmp.eq.f32.partialorder %v212, 8.507059e+37
    %v214 = vand.u32 %v130, 2147483648
    %v215 = vor.u32 1.1754944e-38, %v214
    %v216 = vsel %vm213, %v215, %v211
    %v217 = vrcp.pop %v131
    %v218 = vmul.f32 %v131, %v217
    %v219 = vsub.f32 1.0, %v218
    %v220 = vmul.f32 %v217, %v219
    %v221 = vadd.f32 %v217, %v220
    %vm222 = vweird.f32 %v131
    %vm223 = vweird.f32 %v217
    %vm224 = vmor %vm222, %vm223
    %v225 = vsel %vm224, %v217, %v221
    %v226 = vand.u32 2147483647, %v131
    %vm227 = vcmp.eq.f32.partialorder %v226, 8.507059e+37
    %v228 = vand.u32 %v131, 2147483648
    %v229 = vor.u32 1.1754944e-38, %v228
    %v230 = vsel %vm227, %v229, %v225
    %v231 = vrcp.pop %v132
    %v232 = vmul.f32 %v132, %v231
    %v233 = vsub.f32 1.0, %v232
    %v234 = vmul.f32 %v231, %v233
    %v235 = vadd.f32 %v231, %v234
    %vm236 = vweird.f32 %v132
    %vm237 = vweird.f32 %v231
    %vm238 = vmor %vm236, %vm237
    %v239 = vsel %vm238, %v231, %v235
    %v240 = vand.u32 2147483647, %v132
    %vm241 = vcmp.eq.f32.partialorder %v240, 8.507059e+37
    %v242 = vand.u32 %v132, 2147483648
    %v243 = vor.u32 1.1754944e-38, %v242
    %v244 = vsel %vm241, %v243, %v239
    %vm245 = vcmp.ge.f32.partialorder %v67, 0.0
    %vm246 = vcmp.ge.f32.partialorder %v68, 0.0
    %vm247 = vcmp.ge.f32.partialorder %v69, 0.0
    %vm248 = vcmp.ge.f32.partialorder %v70, 0.0
    %vm249 = vcmp.ge.f32.partialorder %v71, 0.0
    %vm250 = vcmp.ge.f32.partialorder %v72, 0.0
    %vm251 = vcmp.ge.f32.partialorder %v73, 0.0
    %vm252 = vcmp.ge.f32.partialorder %v74, 0.0
    %v253 = vsel %vm245, 1.0, %v110
    %v254 = vsel %vm246, 1.0, %v112
    %v255 = vsel %vm247, 1.0, %v114
    %v256 = vsel %vm248, 1.0, %v116
    %v257 = vsel %vm249, 1.0, %v118
    %v258 = vsel %vm250, 1.0, %v120
    %v259 = vsel %vm251, 1.0, %v122
    %v260 = vsel %vm252, 1.0, %v124
    %v261 = vmul.f32 %v253, %v146
    %v262 = vmul.f32 %v254, %v160
    %v263 = vmul.f32 %v255, %v174
    %v264 = vmul.f32 %v256, %v188
    %v265 = vmul.f32 %v257, %v202
    %v266 = vmul.f32 %v258, %v216
    %v267 = vmul.f32 %v259, %v230
    %v268 = vmul.f32 %v260, %v244
    %v269 = vmax.f32 %v67, 0.0
    %v270 = vmax.f32 %v68, 0.0
    %v271 = vmax.f32 %v69, 0.0
    %v272 = vmax.f32 %v70, 0.0
    %v273 = vmax.f32 %v71, 0.0
    %v274 = vmax.f32 %v72, 0.0
    %v275 = vmax.f32 %v73, 0.0
    %v276 = vmax.f32 %v74, 0.0
    %v277 = vmul.f32 %v67, %v85
    %v278 = vmul.f32 %v68, %v86
    %v279 = vmul.f32 %v69, %v87
    %v280 = vmul.f32 %v70, %v88
    %v281 = vmul.f32 %v71, %v89
    %v282 = vmul.f32 %v72, %v90
    %v283 = vmul.f32 %v73, %v91
    %v284 = vmul.f32 %v74, %v92
    %v285 = vsub.f32 %v269, %v277
    %v286 = vsub.f32 %v270, %v278
    %v287 = vsub.f32 %v271, %v279
    %v288 = vsub.f32 %v272, %v280
    %v289 = vsub.f32 %v273, %v281
    %v290 = vsub.f32 %v274, %v282
    %v291 = vsub.f32 %v275, %v283
    %v292 = vsub.f32 %v276, %v284
    %v293 = vadd.f32 %v110, 1.0
    %v294 = vlog2.pop %v293
    %v295 = vmul.f32 %v294, 0.6931472
    %v296 = vmul.f32 -0.5, %v110
    %v297 = vadd.f32 %v296, 1.0
    %v298 = vmul.f32 %v297, %v110
    %v299 = vand.u32 2147483647, %v110
    %vm300 = vcmp.lt.f32.partialorder %v299, 0.0004427343
    %v301 = vsel %vm300, %v298, %v295
    %v302 = vadd.f32 %v112, 1.0
    %v303 = vlog2.pop %v302
    %v304 = vmul.f32 %v303, 0.6931472
    %v305 = vmul.f32 -0.5, %v112
    %v306 = vadd.f32 %v305, 1.0
    %v307 = vmul.f32 %v306, %v112
    %v308 = vand.u32 2147483647, %v112
    %vm309 = vcmp.lt.f32.partialorder %v308, 0.0004427343
    %v310 = vsel %vm309, %v307, %v304
    %v311 = vadd.f32 %v114, 1.0
    %v312 = vlog2.pop %v311
    %v313 = vmul.f32 %v312, 0.6931472
    %v314 = vmul.f32 -0.5, %v114
    %v315 = vadd.f32 %v314, 1.0
    %v316 = vmul.f32 %v315, %v114
    %v317 = vand.u32 2147483647, %v114
    %vm318 = vcmp.lt.f32.partialorder %v317, 0.0004427343
    %v319 = vsel %vm318, %v316, %v313
    %v320 = vadd.f32 %v116, 1.0
    %v321 = vlog2.pop %v320
    %v322 = vmul.f32 %v321, 0.6931472
    %v323 = vmul.f32 -0.5, %v116
    %v324 = vadd.f32 %v323, 1.0
    %v325 = vmul.f32 %v324, %v116
    %v326 = vand.u32 2147483647, %v116
    %vm327 = vcmp.lt.f32.partialorder %v326, 0.0004427343
    %v328 = vsel %vm327, %v325, %v322
    %v329 = vadd.f32 %v118, 1.0
    %v330 = vlog2.pop %v329
    %v331 = vmul.f32 %v330, 0.6931472
    %v332 = vmul.f32 -0.5, %v118
    %v333 = vadd.f32 %v332, 1.0
    %v334 = vmul.f32 %v333, %v118
    %v335 = vand.u32 2147483647, %v118
    %vm336 = vcmp.lt.f32.partialorder %v335, 0.0004427343
    %v337 = vsel %vm336, %v334, %v331
    %v338 = vadd.f32 %v120, 1.0
    %v339 = vlog2.pop %v338
    %v340 = vmul.f32 %v339, 0.6931472
    %v341 = vmul.f32 -0.5, %v120
    %v342 = vadd.f32 %v341, 1.0
    %v343 = vmul.f32 %v342, %v120
    %v344 = vand.u32 2147483647, %v120
    %vm345 = vcmp.lt.f32.partialorder %v344, 0.0004427343
    %v346 = vsel %vm345, %v343, %v340
    %v347 = vadd.f32 %v122, 1.0
    %v348 = vlog2.pop %v347
    %v349 = vmul.f32 %v348, 0.6931472
    %v350 = vmul.f32 -0.5, %v122
    %v351 = vadd.f32 %v350, 1.0
    %v352 = vmul.f32 %v351, %v122
    %v353 = vand.u32 2147483647, %v122
    %vm354 = vcmp.lt.f32.partialorder %v353, 0.0004427343
    %v355 = vsel %vm354, %v352, %v349
    %v356 = vadd.f32 %v124, 1.0
    %v357 = vlog2.pop %v356
    %v358 = vmul.f32 %v357, 0.6931472
    %v359 = vmul.f32 -0.5, %v124
    %v360 = vadd.f32 %v359, 1.0
    %v361 = vmul.f32 %v360, %v124
    %v362 = vand.u32 2147483647, %v124
    %vm363 = vcmp.lt.f32.partialorder %v362, 0.0004427343
    %v364 = vsel %vm363, %v361, %v358
    %v365 = vadd.f32 %v285, %v301
    %v366 = vadd.f32 %v286, %v310
    %v367 = vadd.f32 %v287, %v319
    %v368 = vadd.f32 %v288, %v328
    %v369 = vadd.f32 %v289, %v337
    %v370 = vadd.f32 %v290, %v346
    %v371 = vadd.f32 %v291, %v355
    %v372 = vadd.f32 %v292, %v364
    %v373 = vld [vmem:[#allocation2] sm:$0xff]
    %v374 = vld [vmem:[#allocation2 + $0x8] sm:$0xff]
    %v375 = vld [vmem:[#allocation2 + $0x10] sm:$0xff]
    %v376 = vld [vmem:[#allocation2 + $0x18] sm:$0xff]
    %v377 = vadd.f32 %v85, %v86
    %378 = vadd.xlane.f32.xlu0 %v377
    %v379 = vpop.xlane.xlu0 %378
    %v380 = vadd.f32 %v87, %v88
    %381 = vadd.xlane.f32.xlu0 %v380
    %v382 = vpop.xlane.xlu0 %381
    %v383 = vadd.f32 %v89, %v90
    %384 = vadd.xlane.f32.xlu0 %v383
    %v385 = vpop.xlane.xlu0 %384
    %v386 = vadd.f32 %v91, %v92
    %387 = vadd.xlane.f32.xlu0 %v386
    %v388 = vpop.xlane.xlu0 %387
    %v389 = vadd.f32 %v373, %v379
    %v390 = vadd.f32 %v374, %v382
    %v391 = vadd.f32 %v375, %v385
    %v392 = vadd.f32 %v376, %v388
    %vm393 = vcmask 7168
    %394 = vst.msk [vmem:[#allocation2] sm:$0xff] %vm393, %v389
    %395 = vst.msk [vmem:[#allocation2 + $0x8] sm:$0xff] %vm393, %v390
    %396 = vst.msk [vmem:[#allocation2 + $0x10] sm:$0xff] %vm393, %v391
    %397 = vst.msk [vmem:[#allocation2 + $0x18] sm:$0xff] %vm393, %v392
    %v398 = vld [vmem:[#allocation3] sm:$0xff]
    %v399 = vld [vmem:[#allocation3 + $0x8] sm:$0xff]
    %v400 = vld [vmem:[#allocation3 + $0x10] sm:$0xff]
    %v401 = vld [vmem:[#allocation3 + $0x18] sm:$0xff]
    %v402 = vmul.f32 %v261, %v85
    %v403 = vmul.f32 %v262, %v86
    %v404 = vmul.f32 %v263, %v87
    %v405 = vmul.f32 %v264, %v88
    %v406 = vmul.f32 %v265, %v89
    %v407 = vmul.f32 %v266, %v90
    %v408 = vmul.f32 %v267, %v91
    %v409 = vmul.f32 %v268, %v92
    %v410 = vadd.f32 %v402, %v403
    %411 = vadd.xlane.f32.xlu0 %v410
    %v412 = vpop.xlane.xlu0 %411
    %v413 = vadd.f32 %v404, %v405
    %414 = vadd.xlane.f32.xlu0 %v413
    %v415 = vpop.xlane.xlu0 %414
    %v416 = vadd.f32 %v406, %v407
    %417 = vadd.xlane.f32.xlu0 %v416
    %v418 = vpop.xlane.xlu0 %417
    %v419 = vadd.f32 %v408, %v409
    %420 = vadd.xlane.f32.xlu0 %v419
    %v421 = vpop.xlane.xlu0 %420
    %v422 = vadd.f32 %v398, %v412
    %v423 = vadd.f32 %v399, %v415
    %v424 = vadd.f32 %v400, %v418
    %v425 = vadd.f32 %v401, %v421
    %426 = vst.msk [vmem:[#allocation3] sm:$0xff] %vm393, %v422
    %427 = vst.msk [vmem:[#allocation3 + $0x8] sm:$0xff] %vm393, %v423
    %428 = vst.msk [vmem:[#allocation3 + $0x10] sm:$0xff] %vm393, %v424
    %429 = vst.msk [vmem:[#allocation3 + $0x18] sm:$0xff] %vm393, %v425
    %v430 = vld [vmem:[#allocation4] sm:$0xff]
    %v431 = vld [vmem:[#allocation4 + $0x8] sm:$0xff]
    %v432 = vld [vmem:[#allocation4 + $0x10] sm:$0xff]
    %v433 = vld [vmem:[#allocation4 + $0x18] sm:$0xff]
    %v434 = vadd.f32 %v261, %v262
    %435 = vadd.xlane.f32.xlu0 %v434
    %v436 = vpop.xlane.xlu0 %435
    %v437 = vadd.f32 %v263, %v264
    %438 = vadd.xlane.f32.xlu0 %v437
    %v439 = vpop.xlane.xlu0 %438
    %v440 = vadd.f32 %v265, %v266
    %441 = vadd.xlane.f32.xlu0 %v440
    %v442 = vpop.xlane.xlu0 %441
    %v443 = vadd.f32 %v267, %v268
    %444 = vadd.xlane.f32.xlu0 %v443
    %v445 = vpop.xlane.xlu0 %444
    %v446 = vadd.f32 %v430, %v436
    %v447 = vadd.f32 %v431, %v439
    %v448 = vadd.f32 %v432, %v442
    %v449 = vadd.f32 %v433, %v445
    %450 = vst.msk [vmem:[#allocation4] sm:$0xff] %vm393, %v446
    %451 = vst.msk [vmem:[#allocation4 + $0x8] sm:$0xff] %vm393, %v447
    %452 = vst.msk [vmem:[#allocation4 + $0x10] sm:$0xff] %vm393, %v448
    %453 = vst.msk [vmem:[#allocation4 + $0x18] sm:$0xff] %vm393, %v449
    %v454 = vld [vmem:[#allocation5] sm:$0xff]
    %v455 = vld [vmem:[#allocation5 + $0x8] sm:$0xff]
    %v456 = vld [vmem:[#allocation5 + $0x10] sm:$0xff]
    %v457 = vld [vmem:[#allocation5 + $0x18] sm:$0xff]
    %v458 = vadd.f32 %v365, %v366
    %459 = vadd.xlane.f32.xlu0 %v458
    %v460 = vpop.xlane.xlu0 %459
    %v461 = vadd.f32 %v367, %v368
    %462 = vadd.xlane.f32.xlu0 %v461
    %v463 = vpop.xlane.xlu0 %462
    %v464 = vadd.f32 %v369, %v370
    %465 = vadd.xlane.f32.xlu0 %v464
    %v466 = vpop.xlane.xlu0 %465
    %v467 = vadd.f32 %v371, %v372
    %468 = vadd.xlane.f32.xlu0 %v467
    %v469 = vpop.xlane.xlu0 %468
    %v470 = vadd.f32 %v454, %v460
    %v471 = vadd.f32 %v455, %v463
    %v472 = vadd.f32 %v456, %v466
    %v473 = vadd.f32 %v457, %v469
    %474 = vst.msk [vmem:[#allocation5] sm:$0xff] %vm393, %v470
    %475 = vst.msk [vmem:[#allocation5 + $0x8] sm:$0xff] %vm393, %v471
    %476 = vst.msk [vmem:[#allocation5 + $0x10] sm:$0xff] %vm393, %v472
    %477 = vst.msk [vmem:[#allocation5 + $0x18] sm:$0xff] %vm393, %v473
    // Predicated region
    $region22: #{tpu_custom_call.1} parent=1 // pred_check
      %p478 = pneg %p42
    $region23: #{tpu_custom_call.1} parent=1 // pred_check_branch
      %480 = sbr.rel (%p478) target = $region25
    $region24: #{tpu_custom_call.1} parent=1 // pred_region
      %v481 = vlaneseq
      %v482 = vand.u32 %v481, 127
      %vm483 = vcmp.eq.s32.totalorder %v482, 0
      %v484 = vld [vmem:[#allocation2] sm:$0xff]
      %v485 = vld [vmem:[#allocation2 + $0x8] sm:$0xff]
      %v486 = vld [vmem:[#allocation2 + $0x10] sm:$0xff]
      %v487 = vld [vmem:[#allocation2 + $0x18] sm:$0xff]
      %489 = vset.pattern.permute.xlu0 0
      %490 = vperm.xlu0 %489, %v484
      %v491 = vpop.permute.xlu0 %490
      %494 = vset.pattern.permute.xlu0 0
      %495 = vperm.xlu0 %494, %v485
      %v496 = vpop.permute.xlu0 %495
      %499 = vset.pattern.permute.xlu0 0
      %500 = vperm.xlu0 %499, %v486
      %v501 = vpop.permute.xlu0 %500
      %504 = vset.pattern.permute.xlu0 0
      %505 = vperm.xlu0 %504, %v487
      %v506 = vpop.permute.xlu0 %505
      %v508 = vsel %vm483, %v491, 0.0
      %v509 = vsel %vm483, %v496, 0.0
      %v510 = vsel %vm483, %v501, 0.0
      %v511 = vsel %vm483, %v506, 0.0
      %vm512 = vcmp.eq.s32.totalorder %v482, 1
      %v513 = vld [vmem:[#allocation3] sm:$0xff]
      %v514 = vld [vmem:[#allocation3 + $0x8] sm:$0xff]
      %v515 = vld [vmem:[#allocation3 + $0x10] sm:$0xff]
      %v516 = vld [vmem:[#allocation3 + $0x18] sm:$0xff]
      %518 = vset.pattern.permute.xlu0 0
      %519 = vperm.xlu0 %518, %v513
      %v520 = vpop.permute.xlu0 %519
      %523 = vset.pattern.permute.xlu0 0
      %524 = vperm.xlu0 %523, %v514
      %v525 = vpop.permute.xlu0 %524
      %528 = vset.pattern.permute.xlu0 0
      %529 = vperm.xlu0 %528, %v515
      %v530 = vpop.permute.xlu0 %529
      %533 = vset.pattern.permute.xlu0 0
      %534 = vperm.xlu0 %533, %v516
      %v535 = vpop.permute.xlu0 %534
      %v537 = vsel %vm512, %v520, 0.0
      %v538 = vsel %vm512, %v525, 0.0
      %v539 = vsel %vm512, %v530, 0.0
      %v540 = vsel %vm512, %v535, 0.0
      %v541 = vadd.f32 %v508, %v537
      %v542 = vadd.f32 %v509, %v538
      %v543 = vadd.f32 %v510, %v539
      %v544 = vadd.f32 %v511, %v540
      %vm545 = vcmp.eq.s32.totalorder %v482, 2
      %v546 = vld [vmem:[#allocation4] sm:$0xff]
      %v547 = vld [vmem:[#allocation4 + $0x8] sm:$0xff]
      %v548 = vld [vmem:[#allocation4 + $0x10] sm:$0xff]
      %v549 = vld [vmem:[#allocation4 + $0x18] sm:$0xff]
      %551 = vset.pattern.permute.xlu0 0
      %552 = vperm.xlu0 %551, %v546
      %v553 = vpop.permute.xlu0 %552
      %556 = vset.pattern.permute.xlu0 0
      %557 = vperm.xlu0 %556, %v547
      %v558 = vpop.permute.xlu0 %557
      %561 = vset.pattern.permute.xlu0 0
      %562 = vperm.xlu0 %561, %v548
      %v563 = vpop.permute.xlu0 %562
      %566 = vset.pattern.permute.xlu0 0
      %567 = vperm.xlu0 %566, %v549
      %v568 = vpop.permute.xlu0 %567
      %v570 = vsel %vm545, %v553, 0.0
      %v571 = vsel %vm545, %v558, 0.0
      %v572 = vsel %vm545, %v563, 0.0
      %v573 = vsel %vm545, %v568, 0.0
      %v574 = vadd.f32 %v541, %v570
      %v575 = vadd.f32 %v542, %v571
      %v576 = vadd.f32 %v543, %v572
      %v577 = vadd.f32 %v544, %v573
      %vm578 = vcmp.eq.s32.totalorder %v482, 3
      %v579 = vld [vmem:[#allocation5] sm:$0xff]
      %v580 = vld [vmem:[#allocation5 + $0x8] sm:$0xff]
      %v581 = vld [vmem:[#allocation5 + $0x10] sm:$0xff]
      %v582 = vld [vmem:[#allocation5 + $0x18] sm:$0xff]
      %584 = vset.pattern.permute.xlu0 0
      %585 = vperm.xlu0 %584, %v579
      %v586 = vpop.permute.xlu0 %585
      %589 = vset.pattern.permute.xlu0 0
      %590 = vperm.xlu0 %589, %v580
      %v591 = vpop.permute.xlu0 %590
      %594 = vset.pattern.permute.xlu0 0
      %595 = vperm.xlu0 %594, %v581
      %v596 = vpop.permute.xlu0 %595
      %599 = vset.pattern.permute.xlu0 0
      %600 = vperm.xlu0 %599, %v582
      %v601 = vpop.permute.xlu0 %600
      %v603 = vsel %vm578, %v586, 0.0
      %v604 = vsel %vm578, %v591, 0.0
      %v605 = vsel %vm578, %v596, 0.0
      %v606 = vsel %vm578, %v601, 0.0
      %v607 = vadd.f32 %v574, %v603
      %v608 = vadd.f32 %v575, %v604
      %v609 = vadd.f32 %v576, %v605
      %v610 = vadd.f32 %v577, %v606
      %611 = vst [vmem:[#allocation11] sm:$0xff] %v607
      %612 = vst [vmem:[#allocation11 + $0x8] sm:$0xff] %v608
      %613 = vst [vmem:[#allocation11 + $0x10] sm:$0xff] %v609
      %614 = vst [vmem:[#allocation11 + $0x18] sm:$0xff] %v610
    $region25: #{tpu_custom_call.1} parent=1 // pred_fallthru
      _
    // Predicated region
    $region26: #{tpu_custom_call.1} parent=1 // pred_check
      _
    $region27: #{tpu_custom_call.1} parent=1 // pred_check_branch
      %616 = sbr.rel (0) target = $region29
    $region28: #{tpu_custom_call.1} parent=1 // pred_region
      %618 = vsyncadd [#allocation8], 0
      %s619 = sshll.u32 [#allocation11], 4
      %s620 = int_to_ptr.vmem [resolvable:$true] %s619
      %s621 = sshll.u32 %s2, 4
      %s622 = int_to_ptr.hbm [resolvable:$true] %s621
      %627 = dma.vmem_to_hbm [thread:$0]  %s620, 512, %s622, [#allocation8], 128, 128, 8
    $region29: #{tpu_custom_call.1} parent=1 // pred_fallthru
      _
    // Predicated region
    $region30: #{tpu_custom_call.1} parent=1 // pred_check
      _
    $region31: #{tpu_custom_call.1} parent=1 // pred_check_branch
      %629 = sbr.rel (0) target = $region33
    $region32: #{tpu_custom_call.1} parent=1 // pred_region
      %631 = dma.done [#allocation8], 512
    $region33: #{tpu_custom_call.1} parent=1 // pred_fallthru
      _
    %632 = vsyncpa [#allocation7], 1
    %633 = vsyncpa [#allocation10], 1
    %634 = vsyncpa [#allocation8], 1

</llo_original>
